<compile_context>
chip_gen: v5e
topology: v5e:2x2
jax: 0.10.0
libtpu: 0.0.40
codegen_flags: <defaults>
</compile_context>

<pallas_src>
import functools

import jax
import jax.numpy as jnp
from jax.experimental import pallas as pl
from jax.experimental.pallas import tpu as pltpu

_LANE = 128


def _spsd_filter_kernel(p_ref, f_ref, w_ref, out_ref, mh_ref, vmax_ref, vidx_ref,
                        *, s_total, f_resident):
    """Grid = (B, C_blocks, S_chunks); S is the innermost reduction axis.

    p_ref   : (1, C_TILE, S_TILE) power-spectrum chunk (last chunk's tail is
              out-of-bounds garbage; masked against s_total in-kernel)
    f_ref   : (N, S_PAD) resident filter  OR  (N, S_TILE) per-chunk filter
    w_ref   : (C_TILE, N) transposed learned weight
    out_ref : (1, C_TILE, N) weighted, MAX-pooled SPSD features   (resident)
    mh_ref  : (1, C_TILE, N) argmax flat spatial-frequency index  (resident)
    vmax_ref: (C_TILE, N, 128) lane-wise running max     (VMEM, persists over S)
    vidx_ref: (C_TILE, N, 128) lane-wise running argmax  (VMEM, persists over S)
    """
    s_idx = pl.program_id(2)
    n_s = pl.num_programs(2)
    s_tile = p_ref.shape[-1]
    n_sub = s_tile // _LANE
    chunk_base = s_idx * s_tile

    # ---- init running accumulators at the first S chunk of each (b, c) ----
    @pl.when(s_idx == 0)
    def _():
        vmax_ref[...] = jnp.full(vmax_ref.shape, -jnp.inf, dtype=jnp.float32)
        vidx_ref[...] = jnp.zeros(vidx_ref.shape, dtype=jnp.int32)

    neg_inf = jnp.float32(-jnp.inf)
    lane2 = jax.lax.broadcasted_iota(jnp.int32, (1, _LANE), 1)       # mask iota
    lane3 = jax.lax.broadcasted_iota(jnp.int32, (1, 1, _LANE), 2)    # index iota

    def fold(k, carry):
        vmax, vidx = carry
        lo = pl.multiple_of(k * _LANE, _LANE)
        pos = chunk_base + lo                                        # scalar i32
        p_sub = p_ref[0, :, pl.ds(lo, _LANE)]                        # (C_TILE, 128)
        # Mask the ragged tail of the last chunk; -inf can never win the max.
        p_sub = jnp.where(pos + lane2 < s_total, p_sub, neg_inf)
        f_start = pl.multiple_of(pos if f_resident else lo, _LANE)
        f_sub = f_ref[:, pl.ds(f_start, _LANE)]                      # (N, 128)
        sub = p_sub[:, None, :] * f_sub[None, :, :]                  # (C_TILE, N, 128)
        better = sub > vmax          # strict > keeps earliest flat index on ties
        vmax = jnp.where(better, sub, vmax)
        vidx = jnp.where(better, pos + lane3, vidx)
        return vmax, vidx

    vmax, vidx = jax.lax.fori_loop(
        0, n_sub, fold, (vmax_ref[...], vidx_ref[...]), unroll=min(4, n_sub))

    # ---- persist across S chunks (only needed before the last chunk) ----
    @pl.when(s_idx < n_s - 1)
    def _():
        vmax_ref[...] = vmax
        vidx_ref[...] = vidx

    # ---- finalize: single cross-lane max + first-occurrence argmax ----
    @pl.when(s_idx == n_s - 1)
    def _():
        pooled = jnp.max(vmax, axis=-1)                              # (C_TILE, N)
        big = jnp.iinfo(jnp.int32).max
        cand = jnp.where(vmax >= pooled[..., None], vidx, big)
        arg = jnp.min(cand, axis=-1)                                 # smallest index at max
        out_ref[0] = pooled * w_ref[...]                             # spsd.T(1,2) * weight
        mh_ref[0] = arg.astype(jnp.int32)


def _pick_c_tile(c):
    """Channel block: full C when small, else a divisor that is a multiple of 8
    (keeps register-carried accumulators <= ~32 vregs per kind)."""
    if c <= 32:
        return c
    for t in (32, 24, 16, 8):
        if c % t == 0:
            return t
    return c  # fallback: correct, may spill for very large non-divisible C


def global_spsd_filter_2d(x, weight, *, min_alpha=0.0, max_alpha=3.0,
                          n_len=8, offset=3.0, s_tile=8192):
    """x: (B, H, W, C) float32; weight: (n_len, C) float32.

    Returns (out, max_holder): out (B, n_len, C) float32,
                               max_holder (B, n_len, C) int32.
    """
    B, H, Wd, C = x.shape
    x_nchw = jnp.transpose(x, (0, 3, 1, 2))                          # (B, C, H, W)

    # Power spectral density (FFT has no Pallas primitive -> plain JAX glue).
    spec = jnp.fft.rfft2(x_nchw, axes=(-2, -1))                      # (B, C, H, Wf)
    power = (spec.real ** 2 + spec.imag ** 2).astype(jnp.float32)
    Wf = Wd // 2 + 1
    S = H * Wf

    # Radial spatial-frequency index grid and alpha-scaling filters.
    ky = jnp.fft.fftfreq(H).astype(jnp.float32) * H                  # signed index units
    kx = jnp.arange(Wf, dtype=jnp.float32)
    r = jnp.sqrt(ky[:, None] ** 2 + kx[None, :] ** 2)                # (H, Wf)
    alphas = jnp.linspace(min_alpha, max_alpha, n_len, dtype=jnp.float32)
    filt = (r[None, :, :] + jnp.float32(offset)) ** alphas[:, None, None]

    p_flat = power.reshape(B, C, S)            # streamed as-is — never padded/copied
    f_flat = filt.reshape(n_len, S).astype(jnp.float32)

    # ---- tiling: S tile multiple of 128, clamped; C blocked if large ----
    s_tile = max(_LANE, (int(s_tile) // _LANE) * _LANE)
    s_round = ((S + _LANE - 1) // _LANE) * _LANE
    s_tile = min(s_tile, s_round)
    n_s = (S + s_tile - 1) // s_tile
    s_pad = n_s * s_tile
    c_tile = _pick_c_tile(C)
    n_c = C // c_tile if C % c_tile == 0 else 1

    # Filter is tiny (N x S); zero-pad its tail so resident pl.ds slices stay
    # in bounds (zero also means OOB power garbage cannot yield a positive product).
    if s_pad != S:
        f_flat = jnp.pad(f_flat, ((0, 0), (0, s_pad - S)))

    # Keep the whole filter VMEM-resident (fetched once for all B) when small.
    f_resident = (n_len * s_pad * 4) <= (8 * 1024 * 1024)
    if f_resident:
        f_spec = pl.BlockSpec((n_len, s_pad), lambda b, c, s: (0, 0))
    else:
        f_spec = pl.BlockSpec((n_len, s_tile), lambda b, c, s: (0, s))

    weight_t = jnp.transpose(weight.astype(jnp.float32), (1, 0))     # (C, N)

    grid = (B, n_c, n_s)

    # VMEM budget: double-buffered P chunk + filter + weight + resident outputs
    # + accumulators, with headroom; capped at ~75% of this chip's VMEM.
    est = 4 * (2 * c_tile * s_tile
               + (n_len * s_pad if f_resident else 2 * n_len * s_tile)
               + 2 * c_tile * n_len
               + 2 * 2 * c_tile * n_len
               + 2 * c_tile * n_len * _LANE)
    try:
        vmem_cap = int(pltpu.get_tpu_info().vmem_capacity_bytes)
    except Exception:
        vmem_cap = 64 * 1024 * 1024
    vmem_limit = int(min(int(0.75 * vmem_cap), max(4 * est, 16 * 1024 * 1024)))

    kernel = functools.partial(_spsd_filter_kernel, s_total=S, f_resident=f_resident)

    out_shapes = (
        jax.ShapeDtypeStruct((B, C, n_len), jnp.float32),
        jax.ShapeDtypeStruct((B, C, n_len), jnp.int32),
    )

    fn = pl.pallas_call(
        kernel,
        out_shape=out_shapes,
        grid_spec=pltpu.PrefetchScalarGridSpec(
            num_scalar_prefetch=0,
            grid=grid,
            in_specs=[
                pl.BlockSpec((1, c_tile, s_tile), lambda b, c, s: (b, c, s)),  # P chunk
                f_spec,                                                        # filter
                pl.BlockSpec((c_tile, n_len), lambda b, c, s: (c, 0)),         # weight^T
            ],
            out_specs=(
                pl.BlockSpec((1, c_tile, n_len), lambda b, c, s: (b, c, 0)),
                pl.BlockSpec((1, c_tile, n_len), lambda b, c, s: (b, c, 0)),
            ),
            scratch_shapes=[
                pltpu.VMEM((c_tile, n_len, _LANE), jnp.float32),   # running lane-wise max
                pltpu.VMEM((c_tile, n_len, _LANE), jnp.int32),     # running lane-wise argmax
            ],
        ),
        compiler_params=pltpu.CompilerParams(
            dimension_semantics=("parallel", "parallel", "arbitrary"),
            vmem_limit_bytes=vmem_limit,
        ),
    )
    out_cn, mh_cn = fn(p_flat, f_flat, weight_t)
    # Kernel works in (C, N) layout (full 8-sublane vregs when N=8, even for
    # C < 8); transpose the tiny outputs back to the module's (B, len, dim).
    return jnp.transpose(out_cn, (0, 2, 1)), jnp.transpose(mh_cn, (0, 2, 1))


def _reference(x, weight, *, min_alpha, max_alpha, n_len, offset):
    """Pure-JAX reference of the same reconstructed SPSD semantics."""
    B, H, Wd, C = x.shape
    x_nchw = jnp.transpose(x, (0, 3, 1, 2))
    spec = jnp.fft.rfft2(x_nchw, axes=(-2, -1))
    power = (spec.real ** 2 + spec.imag ** 2).astype(jnp.float32)
    Wf = Wd // 2 + 1
    S = H * Wf
    ky = jnp.fft.fftfreq(H).astype(jnp.float32) * H
    kx = jnp.arange(Wf, dtype=jnp.float32)
    r = jnp.sqrt(ky[:, None] ** 2 + kx[None, :] ** 2)
    alphas = jnp.linspace(min_alpha, max_alpha, n_len, dtype=jnp.float32)
    filt = ((r[None] + jnp.float32(offset)) ** alphas[:, None, None]).reshape(n_len, S)
    p = power.reshape(B, C, S)
    scaled = p[:, None, :, :] * filt[None, :, None, :]       # (B, N, C, S)
    pooled = jnp.max(scaled, axis=-1)                        # (B, N, C)
    arg = jnp.argmax(scaled, axis=-1).astype(jnp.int32)      # first occurrence
    return pooled * weight[None], arg


if __name__ == "__main__":
    key = jax.random.PRNGKey(0)
    kx_, kw_ = jax.random.split(key)

    # Small shapes consistent with the module: dim=C=4, len=N=8, 16x16 spatial.
    B, H, W, C = 2, 16, 16, 4
    N_LEN = 8

    x = jax.random.normal(kx_, (B, H, W, C), dtype=jnp.float32)
    # nn.Parameter(torch.randn(len, dim) * 0.02) — deterministic synthetic init.
    weight = 0.02 * jax.random.normal(kw_, (N_LEN, C), dtype=jnp.float32)

    ref_out, ref_mh = _reference(
        x, weight, min_alpha=0.0, max_alpha=3.0, n_len=N_LEN, offset=3.0)

    # s_tile=128 forces multiple S chunks at this toy size (S = 16*9 = 144),
    # exercising streaming init/accumulate/finalize AND ragged-tail masking.
    out, max_holder = global_spsd_filter_2d(
        x, weight, min_alpha=0.0, max_alpha=3.0, n_len=N_LEN, offset=3.0,
        s_tile=128)
    jax.block_until_ready((out, max_holder))

    assert out.shape == (B, N_LEN, C) and out.dtype == jnp.float32
    assert max_holder.shape == (B, N_LEN, C) and max_holder.dtype == jnp.int32
    assert jnp.allclose(out, ref_out, rtol=1e-5, atol=1e-6), "value mismatch"
    assert bool(jnp.all(max_holder == ref_mh)), "argmax mismatch"

    # Default (large) tile: single-chunk path, resident filter, masked tail.
    out2, mh2 = global_spsd_filter_2d(
        x, weight, min_alpha=0.0, max_alpha=3.0, n_len=N_LEN, offset=3.0)
    jax.block_until_ready((out2, mh2))
    assert jnp.allclose(out2, ref_out, rtol=1e-5, atol=1e-6), "value mismatch (1-chunk)"
    assert bool(jnp.all(mh2 == ref_mh)), "argmax mismatch (1-chunk)"

    print("KERNEL_OK")
</pallas_src>

<mosaic_0001>
module attributes {stable_mosaic.version = 11 : i64} {
  func.func @_spsd_filter_kernel(%arg0: i32, %arg1: i32, %arg2: i32, %arg3: memref<1x4x128xf32, #tpu.memory_space<vmem>>, %arg4: memref<8x256xf32, #tpu.memory_space<vmem>>, %arg5: memref<4x8xf32, #tpu.memory_space<vmem>>, %arg6: memref<1x4x8xf32, #tpu.memory_space<vmem>>, %arg7: memref<1x4x8xi32, #tpu.memory_space<vmem>>, %arg8: memref<4x8x128xf32, #tpu.memory_space<vmem>>, %arg9: memref<4x8x128xi32, #tpu.memory_space<vmem>>) attributes {dimension_semantics = [#tpu.dimension_semantics<parallel>, #tpu.dimension_semantics<parallel>, #tpu.dimension_semantics<arbitrary>], iteration_bounds = array<i64: 2, 1, 2>, scalar_prefetch = 0 : i64, scratch_operands = 2 : i64, tpu.core_type = #tpu.core_type<tc>, window_params = [{transform_indices = @transform_0, window_bounds = array<i64: 1, 4, 128>}, {pipeline_mode = #tpu.pipeline_mode<synchronous>, transform_indices = @transform_1, window_bounds = array<i64: 8, 256>}, {transform_indices = @transform_2, window_bounds = array<i64: 4, 8>}, {transform_indices = @transform_3, window_bounds = array<i64: 1, 4, 8>}, {transform_indices = @transform_4, window_bounds = array<i64: 1, 4, 8>}]} {
    %c128_i32 = arith.constant 128 : i32
    %0 = arith.muli %arg2, %c128_i32 : i32
    %c0_i32 = arith.constant 0 : i32
    %1 = arith.cmpi eq, %arg2, %c0_i32 : i32
    %2 = arith.extui %1 : i1 to i32
    %c0_i32_0 = arith.constant 0 : i32
    %3 = arith.cmpi ne, %2, %c0_i32_0 : i32
    scf.if %3 {
      %cst_15 = arith.constant 0xFF800000 : f32
      %43 = vector.broadcast %cst_15 : f32 to vector<4x8x128xf32>
      %c0_16 = arith.constant 0 : index
      %c0_17 = arith.constant 0 : index
      %c0_18 = arith.constant 0 : index
      %44 = vector.load %arg8[%c0_16, %c0_17, %c0_18] : memref<4x8x128xf32, #tpu.memory_space<vmem>>, vector<4x8x128xf32>
      tpu.vector_store %arg8[%c0_16, %c0_17, %c0_18], %43 {strides = array<i32>} : memref<4x8x128xf32, #tpu.memory_space<vmem>>, vector<4x8x128xf32>,
      %c0_i32_19 = arith.constant 0 : i32
      %45 = vector.broadcast %c0_i32_19 : i32 to vector<4x8x128xi32>
      %c0_20 = arith.constant 0 : index
      %c0_21 = arith.constant 0 : index
      %c0_22 = arith.constant 0 : index
      %46 = vector.load %arg9[%c0_20, %c0_21, %c0_22] : memref<4x8x128xi32, #tpu.memory_space<vmem>>, vector<4x8x128xi32>
      tpu.vector_store %arg9[%c0_20, %c0_21, %c0_22], %45 {strides = array<i32>} : memref<4x8x128xi32, #tpu.memory_space<vmem>>, vector<4x8x128xi32>,
    } else {
    }
    %4 = tpu.iota {dimensions = array<i32: 1>} : vector<1x128xi32>
    %5 = tpu.iota {dimensions = array<i32: 2>} : vector<1x1x128xi32>
    %c0 = arith.constant 0 : index
    %c0_1 = arith.constant 0 : index
    %c0_2 = arith.constant 0 : index
    %6 = vector.load %arg8[%c0, %c0_1, %c0_2] : memref<4x8x128xf32, #tpu.memory_space<vmem>>, vector<4x8x128xf32>
    %c0_3 = arith.constant 0 : index
    %c0_4 = arith.constant 0 : index
    %c0_5 = arith.constant 0 : index
    %7 = vector.load %arg9[%c0_3, %c0_4, %c0_5] : memref<4x8x128xi32, #tpu.memory_space<vmem>>, vector<4x8x128xi32>
    %cst = arith.constant 0xFF800000 : f32
    %c0_i32_6 = arith.constant 0 : i32
    %c128_i32_7 = arith.constant 128 : i32
    %8 = arith.muli %c0_i32_6, %c128_i32_7 : i32
    %9 = tpu.assume_multiple %8, 128 : i32
    %10 = arith.addi %0, %9 : i32
    %c0_8 = arith.constant 0 : index
    %c0_9 = arith.constant 0 : index
    %11 = arith.index_cast %9 : i32 to index
    %12 = vector.load %arg3[%c0_8, %c0_9, %11] : memref<1x4x128xf32, #tpu.memory_space<vmem>>, vector<1x4x128xf32>
    %13 = vector.shape_cast %12 : vector<1x4x128xf32> to vector<4x128xf32>
    %14 = vector.broadcast %10 : i32 to vector<1x128xi32>
    %15 = arith.addi %14, %4 : vector<1x128xi32>
    %c144_i32 = arith.constant 144 : i32
    %16 = vector.broadcast %c144_i32 : i32 to vector<1x128xi32>
    %17 = arith.cmpi slt, %15, %16 : vector<1x128xi32>
    %18 = vector.shape_cast %17 : vector<1x128xi1> to vector<1x128xi1>
    %19 = vector.broadcast %18 : vector<1x128xi1> to vector<4x128xi1>
    %20 = vector.broadcast %cst : f32 to vector<4x128xf32>
    %21 = arith.select %19, %13, %20 : vector<4x128xi1>, vector<4x128xf32>
    %22 = tpu.assume_multiple %10, 128 : i32
    %c0_10 = arith.constant 0 : index
    %23 = arith.index_cast %22 : i32 to index
    %24 = vector.load %arg4[%c0_10, %23] : memref<8x256xf32, #tpu.memory_space<vmem>>, vector<8x128xf32>
    %25 = vector.shape_cast %21 : vector<4x128xf32> to vector<4x1x128xf32>
    %26 = vector.shape_cast %24 : vector<8x128xf32> to vector<1x8x128xf32>
    %27 = vector.broadcast %25 : vector<4x1x128xf32> to vector<4x8x128xf32>
    %28 = vector.broadcast %26 : vector<1x8x128xf32> to vector<4x8x128xf32>
    %29 = arith.mulf %27, %28 : vector<4x8x128xf32>
    %30 = arith.cmpf ogt, %29, %6 : vector<4x8x128xf32>
    %31 = arith.select %30, %29, %6 : vector<4x8x128xi1>, vector<4x8x128xf32>
    %32 = vector.broadcast %10 : i32 to vector<1x1x128xi32>
    %33 = arith.addi %32, %5 : vector<1x1x128xi32>
    %34 = vector.shape_cast %33 : vector<1x1x128xi32> to vector<1x1x128xi32>
    %35 = vector.broadcast %34 : vector<1x1x128xi32> to vector<4x8x128xi32>
    %36 = arith.select %30, %35, %7 : vector<4x8x128xi1>, vector<4x8x128xi32>
    %c1_i32 = arith.constant 1 : i32
    %c1_i32_11 = arith.constant 1 : i32
    %37 = arith.cmpi slt, %arg2, %c1_i32_11 : i32
    %38 = arith.extui %37 : i1 to i32
    %c0_i32_12 = arith.constant 0 : i32
    %39 = arith.cmpi ne, %38, %c0_i32_12 : i32
    scf.if %39 {
      %c0_15 = arith.constant 0 : index
      %c0_16 = arith.constant 0 : index
      %c0_17 = arith.constant 0 : index
      %43 = vector.load %arg8[%c0_15, %c0_16, %c0_17] : memref<4x8x128xf32, #tpu.memory_space<vmem>>, vector<4x8x128xf32>
      tpu.vector_store %arg8[%c0_15, %c0_16, %c0_17], %31 {strides = array<i32>} : memref<4x8x128xf32, #tpu.memory_space<vmem>>, vector<4x8x128xf32>,
      %c0_18 = arith.constant 0 : index
      %c0_19 = arith.constant 0 : index
      %c0_20 = arith.constant 0 : index
      %44 = vector.load %arg9[%c0_18, %c0_19, %c0_20] : memref<4x8x128xi32, #tpu.memory_space<vmem>>, vector<4x8x128xi32>
      tpu.vector_store %arg9[%c0_18, %c0_19, %c0_20], %36 {strides = array<i32>} : memref<4x8x128xi32, #tpu.memory_space<vmem>>, vector<4x8x128xi32>,
    } else {
    }
    %c1_i32_13 = arith.constant 1 : i32
    %40 = arith.cmpi eq, %arg2, %c1_i32_13 : i32
    %41 = arith.extui %40 : i1 to i32
    %c0_i32_14 = arith.constant 0 : i32
    %42 = arith.cmpi ne, %41, %c0_i32_14 : i32
    scf.if %42 {
      %cst_15 = arith.constant dense<0xFF800000> : vector<4x8xf32>
      %43 = vector.multi_reduction <maximumf>, %31, %cst_15 [2] : vector<4x8x128xf32> to vector<4x8xf32>
      %44 = vector.shape_cast %43 : vector<4x8xf32> to vector<4x8x1xf32>
      %45 = vector.broadcast %44 : vector<4x8x1xf32> to vector<4x8x128xf32>
      %46 = arith.cmpf oge, %31, %45 : vector<4x8x128xf32>
      %c2147483647_i32 = arith.constant 2147483647 : i32
      %47 = vector.broadcast %c2147483647_i32 : i32 to vector<4x8x128xi32>
      %48 = arith.select %46, %36, %47 : vector<4x8x128xi1>, vector<4x8x128xi32>
      %cst_16 = arith.constant dense<2147483647> : vector<4x8xi32>
      %49 = vector.multi_reduction <minsi>, %48, %cst_16 [2] : vector<4x8x128xi32> to vector<4x8xi32>
      %c0_17 = arith.constant 0 : index
      %c0_18 = arith.constant 0 : index
      %50 = vector.load %arg5[%c0_17, %c0_18] : memref<4x8xf32, #tpu.memory_space<vmem>>, vector<4x8xf32>
      %51 = arith.mulf %43, %50 : vector<4x8xf32>
      %c0_19 = arith.constant 0 : index
      %c0_20 = arith.constant 0 : index
      %c0_21 = arith.constant 0 : index
      %52 = vector.load %arg6[%c0_19, %c0_20, %c0_21] : memref<1x4x8xf32, #tpu.memory_space<vmem>>, vector<1x4x8xf32>
      %53 = vector.shape_cast %52 : vector<1x4x8xf32> to vector<4x8xf32>
      %54 = vector.shape_cast %51 : vector<4x8xf32> to vector<1x4x8xf32>
      tpu.vector_store %arg6[%c0_19, %c0_20, %c0_21], %54 {strides = array<i32>} : memref<1x4x8xf32, #tpu.memory_space<vmem>>, vector<1x4x8xf32>,
      %c0_22 = arith.constant 0 : index
      %c0_23 = arith.constant 0 : index
      %c0_24 = arith.constant 0 : index
      %55 = vector.load %arg7[%c0_22, %c0_23, %c0_24] : memref<1x4x8xi32, #tpu.memory_space<vmem>>, vector<1x4x8xi32>
      %56 = vector.shape_cast %55 : vector<1x4x8xi32> to vector<4x8xi32>
      %57 = vector.shape_cast %49 : vector<4x8xi32> to vector<1x4x8xi32>
      tpu.vector_store %arg7[%c0_22, %c0_23, %c0_24], %57 {strides = array<i32>} : memref<1x4x8xi32, #tpu.memory_space<vmem>>, vector<1x4x8xi32>,
    } else {
    }
    return
  }
  func.func @transform_0(%arg0: i32, %arg1: i32, %arg2: i32) -> (i32, i32, i32) {
    %c0_i32 = arith.constant 0 : i32
    return %arg0, %arg1, %arg2 : i32, i32, i32
  }
  func.func @transform_1(%arg0: i32, %arg1: i32, %arg2: i32) -> (i32, i32) {
    %c0_i32 = arith.constant 0 : i32
    %c0_i32_0 = arith.constant 0 : i32
    %c0_i32_1 = arith.constant 0 : i32
    return %c0_i32, %c0_i32_0 : i32, i32
  }
  func.func @transform_2(%arg0: i32, %arg1: i32, %arg2: i32) -> (i32, i32) {
    %c0_i32 = arith.constant 0 : i32
    %c0_i32_0 = arith.constant 0 : i32
    return %arg1, %c0_i32 : i32, i32
  }
  func.func @transform_3(%arg0: i32, %arg1: i32, %arg2: i32) -> (i32, i32, i32) {
    %c0_i32 = arith.constant 0 : i32
    %c0_i32_0 = arith.constant 0 : i32
    return %arg0, %arg1, %c0_i32 : i32, i32, i32
  }
  func.func @transform_4(%arg0: i32, %arg1: i32, %arg2: i32) -> (i32, i32, i32) {
    %c0_i32 = arith.constant 0 : i32
    %c0_i32_0 = arith.constant 0 : i32
    return %arg0, %arg1, %c0_i32 : i32, i32, i32
  }
}

</mosaic_0001>

<llo_original>
// kernel: tpu_custom_call.1
$region0: #{tpu_custom_call.1}
  #allocation0 [shape = 'u32[]', space=smem, size = 0x4, offset = 0x4, fixed_abs, tag = 'smem constant byte address 0x4 - core index']
  #allocation1 [shape = 'u32[72,128]{1,0:T(1,128)}', space=vmem, size = 0x9000, scoped, tag = 'internal scratch']
  #allocation2 [shape = 'f32[4,8,128]{2,1,0:T(8,128)}', space=vmem, size = 0x4000, scoped, tag = 'scratch operand']
  #allocation3 [shape = 's32[4,8,128]{2,1,0:T(8,128)}', space=vmem, size = 0x4000, scoped, tag = 'scratch operand']
  %s0 = inlined_call_operand.hbm [shape: f32[2,4,144], index: 0, kind: input, shape index: {}]
  %s1 = inlined_call_operand.hbm [shape: f32[8,256], index: 1, kind: input, shape index: {}]
  %s2 = inlined_call_operand.hbm [shape: f32[4,8], index: 2, kind: input, shape index: {}]
  %s3 = inlined_call_operand.hbm [shape: f32[2,4,8], index: 3, kind: output, shape index: {0}]
  %s4 = inlined_call_operand.hbm [shape: s32[2,4,8], index: 4, kind: output, shape index: {1}]
  %5 = xla_tuple %s3, %s4
  %s6 = sld [smem:[#allocation0]]
  $region77: #{tpu_custom_call.1} parent=0
    _
  %s8 = ssub.s32 1, %s6
  %s9 = scalar_select 0, %s8, %s6
  $region1: #{tpu_custom_call.1} parent=0
    #allocation4 [shape = 'u8[4096]{0}', space=vmem, size = 0x1000, scoped, tag = 'input window, operand 0']
    #allocation5 [shape = 's32[2]{0}', space=sflag, size = 0x8, scoped, tag = 'scoped memory for tpu_custom_call.1']
    #allocation6 [shape = 's32[2]{0}', space=sflag, size = 0x8, scoped, tag = 'scoped memory for tpu_custom_call.1']
    #allocation7 [shape = 'u8[8192]{0}', space=vmem, size = 0x2000, scoped, tag = 'input window, operand 1, single buffered']
    #allocation8 [shape = 's32[1]{0}', space=sflag, size = 0x4, scoped, tag = 'scoped memory for tpu_custom_call.1']
    #allocation9 [shape = 'u8[2048]{0}', space=vmem, size = 0x800, scoped, tag = 'input window, operand 2, single buffered']
    #allocation10 [shape = 'u8[4096]{0}', space=vmem, size = 0x1000, scoped, tag = 'output window, operand 0']
    #allocation11 [shape = 'u8[4096]{0}', space=vmem, size = 0x1000, scoped, tag = 'output window, operand 1']
    #allocation12 [shape = 's32[2]{0}', space=sflag, size = 0x8, scoped, tag = 'scoped memory for tpu_custom_call.1']
    %10 = vsyncpa [#allocation5], 0
    %s11 = scalar_lea.sflag [#allocation5], 1
    %12 = vsyncpa %s11, 0
    %13 = vsyncpa [#allocation8], 0
    %14 = vsyncpa [#allocation6], 0
    %s15 = scalar_lea.sflag [#allocation6], 1
    %16 = vsyncpa %s15, 0
    %17 = vsyncpa [#allocation12], 0
    %s18 = scalar_lea.sflag [#allocation12], 1
    %19 = vsyncpa %s18, 0
    loop: start=0, step=1, limit=6
    $region2: #{tpu_custom_call.1} parent=1 // loop_pre_header
      _
    $region3: #{tpu_custom_call.1} parent=1 // loop_header
      %s21 = sphi 0, %s25
      %p22 = scmp.ge.s32.totalorder %s21, 6
      %s28 = sphi 0, %s47
      %s29 = sphi 0, %s43
      %s30 = sphi 0, %s39
      %s31 = sphi 0, %s28
      %s32 = sphi 0, %s29
      %s33 = sphi 0, %s30
      %s34 = sphi 0, %s31
      %s35 = sphi 0, %s32
      %s36 = sphi 0, %s33
      %s54 = sphi 0, %s56
      %s57 = sphi 0, %s54
      %s58 = sphi 0, %s57
      %s74 = sphi 0, %s58
      %s78 = sphi 0, %s78
      %s80 = sphi 0, %s78
      %s81 = sphi 0, %s80
      %s95 = sphi 0, %s81
      %s101 = sphi 0, %s103
      %s104 = sphi 0, %s101
      %s105 = sphi 0, %s104
      %s121 = sphi 0, %s105
      %s129 = sphi 0, %s131
      %s132 = sphi 0, %s129
      %s133 = sphi 0, %s132
      %s149 = sphi 0, %s133
      %s157 = sphi 0, %s159
      %s160 = sphi 0, %s157
      %s161 = sphi 0, %s160
      %s177 = sphi 0, %s161
    $region4: #{tpu_custom_call.1} parent=1 // loop_header_branch
      %24 = sbr.rel (%p22) target = $region8
    $region5: #{tpu_custom_call.1} parent=1 // loop_body
      %s26 = ssub.s32 %s21, 1
      %s27 = ssub.s32 %s21, 2
      %s37 = sadd.s32 1, %s30
      %p38 = scmp.ge.s32.totalorder %s37, 2
      %s39 = scalar_select %p38, 0, %s37
      %s40 = sadd.s32 1, %s29
      %s41 = scalar_select %p38, %s40, %s29
      %p42 = scmp.ge.s32.totalorder %s41, 1
      %s43 = scalar_select %p42, 0, %s41
      %s44 = sadd.s32 1, %s28
      %s45 = scalar_select %p42, %s44, %s28
      %p46 = scmp.ge.s32.totalorder %s45, 2
      %s47 = scalar_select %p46, 0, %s45
      %s48 = ssub.s32 %s28, %s47
      %s49 = ssub.s32 %s29, %s43
      %s50 = sor.u32 %s48, %s49
      %s51 = ssub.s32 %s30, %s39
      %s52 = sor.u32 %s50, %s51
      %p53 = scmp.eq.s32.totalorder %s52, 0
      %s55 = sadd.s32 %s54, 1
      %s56 = scalar_select %p53, %s54, %s55
      %p59 = pneg %p53
      %p60 = scmp.eq.s32.totalorder %s21, 3
      %p61 = por %p59, %p60
      %p62 = scmp.ne.s32.totalorder %s54, %s57
      %p63 = scmp.eq.s32.totalorder %s21, 0
      %p64 = por %p62, %p63
      %p65 = scmp.ne.s32.totalorder %s54, %s57
      %p66 = scmp.eq.s32.totalorder %s26, 3
      %p67 = por %p65, %p66
      %p68 = scmp.ne.s32.totalorder %s57, %s58
      %p69 = scmp.eq.s32.totalorder %s26, 0
      %p70 = por %p68, %p69
      %p71 = scmp.ne.s32.totalorder %s57, %s58
      %p72 = scmp.eq.s32.totalorder %s27, 3
      %p73 = por %p71, %p72
      %p75 = scmp.ne.s32.totalorder %s58, %s74
      %p76 = scmp.eq.s32.totalorder %s27, 0
      %p77 = por %p75, %p76
      %s79 = sadd.s32 %s78, 1
      %p82 = scmp.eq.s32.totalorder %s21, 3
      %p83 = scmp.ne.s32.totalorder %s78, %s80
      %p84 = scmp.eq.s32.totalorder %s21, 0
      %p85 = por %p83, %p84
      %p86 = scmp.ne.s32.totalorder %s78, %s80
      %p87 = scmp.eq.s32.totalorder %s26, 3
      %p88 = por %p86, %p87
      %p89 = scmp.ne.s32.totalorder %s80, %s81
      %p90 = scmp.eq.s32.totalorder %s26, 0
      %p91 = por %p89, %p90
      %p92 = scmp.ne.s32.totalorder %s80, %s81
      %p93 = scmp.eq.s32.totalorder %s27, 3
      %p94 = por %p92, %p93
      %p96 = scmp.ne.s32.totalorder %s81, %s95
      %p97 = scmp.eq.s32.totalorder %s27, 0
      %p98 = por %p96, %p97
      %s99 = ssub.s32 %s29, %s43
      %p100 = scmp.eq.s32.totalorder %s99, 0
      %s102 = sadd.s32 %s101, 1
      %s103 = scalar_select %p100, %s101, %s102
      %p106 = pneg %p100
      %p107 = scmp.eq.s32.totalorder %s21, 3
      %p108 = por %p106, %p107
      %p109 = scmp.ne.s32.totalorder %s101, %s104
      %p110 = scmp.eq.s32.totalorder %s21, 0
      %p111 = por %p109, %p110
      %p112 = scmp.ne.s32.totalorder %s101, %s104
      %p113 = scmp.eq.s32.totalorder %s26, 3
      %p114 = por %p112, %p113
      %p115 = scmp.ne.s32.totalorder %s104, %s105
      %p116 = scmp.eq.s32.totalorder %s26, 0
      %p117 = por %p115, %p116
      %p118 = scmp.ne.s32.totalorder %s104, %s105
      %p119 = scmp.eq.s32.totalorder %s27, 3
      %p120 = por %p118, %p119
      %p122 = scmp.ne.s32.totalorder %s105, %s121
      %p123 = scmp.eq.s32.totalorder %s27, 0
      %p124 = por %p122, %p123
      %s125 = ssub.s32 %s28, %s47
      %s126 = ssub.s32 %s29, %s43
      %s127 = sor.u32 %s125, %s126
      %p128 = scmp.eq.s32.totalorder %s127, 0
      %s130 = sadd.s32 %s129, 1
      %s131 = scalar_select %p128, %s129, %s130
      %p134 = pneg %p128
      %p135 = scmp.eq.s32.totalorder %s21, 3
      %p136 = por %p134, %p135
      %p137 = scmp.ne.s32.totalorder %s129, %s132
      %p138 = scmp.eq.s32.totalorder %s21, 0
      %p139 = por %p137, %p138
      %p140 = scmp.ne.s32.totalorder %s129, %s132
      %p141 = scmp.eq.s32.totalorder %s26, 3
      %p142 = por %p140, %p141
      %p143 = scmp.ne.s32.totalorder %s132, %s133
      %p144 = scmp.eq.s32.totalorder %s26, 0
      %p145 = por %p143, %p144
      %p146 = scmp.ne.s32.totalorder %s132, %s133
      %p147 = scmp.eq.s32.totalorder %s27, 3
      %p148 = por %p146, %p147
      %p150 = scmp.ne.s32.totalorder %s133, %s149
      %p151 = scmp.eq.s32.totalorder %s27, 0
      %p152 = por %p150, %p151
      %s153 = ssub.s32 %s28, %s47
      %s154 = ssub.s32 %s29, %s43
      %s155 = sor.u32 %s153, %s154
      %p156 = scmp.eq.s32.totalorder %s155, 0
      %s158 = sadd.s32 %s157, 1
      %s159 = scalar_select %p156, %s157, %s158
      %p162 = pneg %p156
      %p163 = scmp.eq.s32.totalorder %s21, 3
      %p164 = por %p162, %p163
      %p165 = scmp.ne.s32.totalorder %s157, %s160
      %p166 = scmp.eq.s32.totalorder %s21, 0
      %p167 = por %p165, %p166
      %p168 = scmp.ne.s32.totalorder %s157, %s160
      %p169 = scmp.eq.s32.totalorder %s26, 3
      %p170 = por %p168, %p169
      %p171 = scmp.ne.s32.totalorder %s160, %s161
      %p172 = scmp.eq.s32.totalorder %s26, 0
      %p173 = por %p171, %p172
      %p174 = scmp.ne.s32.totalorder %s160, %s161
      %p175 = scmp.eq.s32.totalorder %s27, 3
      %p176 = por %p174, %p175
      %p178 = scmp.ne.s32.totalorder %s161, %s177
      %p179 = scmp.eq.s32.totalorder %s27, 0
      %p180 = por %p178, %p179
      %p181 = scmp.le.s32.totalorder 1, %s21
      %p182 = scmp.lt.s32.totalorder %s21, 5
      %p183 = pnand %p181, %p182
      %p184 = pneg %p183
      // Predicated region
      $region9: #{tpu_custom_call.1} parent=5 // pred_check
        _
      $region10: #{tpu_custom_call.1} parent=5 // pred_check_branch
        %186 = sbr.rel (%p183) target = $region12
      $region11: #{tpu_custom_call.1} parent=5 // pred_region
        %s187 = ssub.s32 %s21, 1
        // Predicated region
        $region13: #{tpu_custom_call.1} parent=11 // pred_check
          %p188 = pneg %p91
        $region14: #{tpu_custom_call.1} parent=11 // pred_check_branch
          %190 = sbr.rel (%p188) target = $region16
        $region15: #{tpu_custom_call.1} parent=11 // pred_region
          %192 = vsyncadd [#allocation8], 0
          %s194 = sshll.u32 %s1, 4
          %s195 = int_to_ptr.hbm [resolvable:$true] %s194
          %s196 = sshll.u32 [#allocation7], 4
          %s197 = int_to_ptr.vmem [resolvable:$true] %s196
          %199 = dma.hbm_to_vmem [thread:$0]  %s195, 256, %s197, [#allocation8]
        $region16: #{tpu_custom_call.1} parent=11 // pred_fallthru
          _
        // Predicated region
        $region17: #{tpu_custom_call.1} parent=11 // pred_check
          %p200 = pneg %p117
        $region18: #{tpu_custom_call.1} parent=11 // pred_check_branch
          %202 = sbr.rel (%p200) target = $region20
        $region19: #{tpu_custom_call.1} parent=11 // pred_region
          %204 = vsyncadd [#allocation8], 0
          %s205 = smul.addr %s32, 4
          %s206 = scalar_lea.hbm %s2, %s205
          %s208 = sshll.u32 %s206, 4
          %s209 = int_to_ptr.hbm [resolvable:$true] %s208
          %s210 = sshll.u32 [#allocation9], 4
          %s211 = int_to_ptr.vmem [resolvable:$true] %s210
          %213 = dma.hbm_to_vmem [thread:$0]  %s209, 64, %s211, [#allocation8]
        $region20: #{tpu_custom_call.1} parent=11 // pred_fallthru
          _
      $region12: #{tpu_custom_call.1} parent=5 // pred_fallthru
        _
      %p214 = scmp.lt.s32.totalorder %s21, 4
      // Predicated region
      $region21: #{tpu_custom_call.1} parent=5 // pred_check
        %p215 = pneg %p214
      $region22: #{tpu_custom_call.1} parent=5 // pred_check_branch
        %217 = sbr.rel (%p215) target = $region24
      $region23: #{tpu_custom_call.1} parent=5 // pred_region
        // Predicated region
        $region25: #{tpu_custom_call.1} parent=23 // pred_check
          %p218 = pneg %p64
        $region26: #{tpu_custom_call.1} parent=23 // pred_check_branch
          %220 = sbr.rel (%p218) target = $region28
        $region27: #{tpu_custom_call.1} parent=23 // pred_region
          %s221 = sand.u32 %s54, 1
          %s222 = scalar_lea.sflag [#allocation5], %s221
          %s223 = sand.u32 %s54, 1
          %s224 = smul.addr %s223, 4
          %s225 = scalar_lea.vmem [#allocation4], %s224
          %227 = vsyncadd %s222, 0
          %s228 = smul.addr %s29, 2
          %s229 = sadd.s32 %s30, %s228
          %s230 = smul.addr %s28, 2
          %s231 = sadd.s32 %s229, %s230
          %s232 = smul.addr %s231, 4
          %s233 = scalar_lea.hbm %s0, %s232
          %s235 = sshll.u32 %s233, 4
          %s236 = int_to_ptr.hbm [resolvable:$true] %s235
          %s237 = sshll.u32 %s225, 4
          %s238 = int_to_ptr.vmem [resolvable:$true] %s237
          %240 = dma.hbm_to_vmem [thread:$0]  %s236, 64, %s238, %s222
        $region28: #{tpu_custom_call.1} parent=23 // pred_fallthru
          _
      $region24: #{tpu_custom_call.1} parent=5 // pred_fallthru
        _
      %p241 = scmp.le.s32.totalorder 1, %s21
      %p242 = scmp.lt.s32.totalorder %s21, 5
      %p243 = pnand %p241, %p242
      %p244 = pneg %p243
      // Predicated region
      $region29: #{tpu_custom_call.1} parent=5 // pred_check
        _
      $region30: #{tpu_custom_call.1} parent=5 // pred_check_branch
        %246 = sbr.rel (%p243) target = $region32
      $region31: #{tpu_custom_call.1} parent=5 // pred_region
        %s247 = ssub.s32 %s21, 1
        %s248 = sand.u32 %s57, 1
        %s249 = scalar_lea.sflag [#allocation5], %s248
        %s250 = sand.u32 %s57, 1
        %s251 = smul.addr %s250, 4
        %s252 = scalar_lea.vmem [#allocation4], %s251
        // Predicated region
        $region33: #{tpu_custom_call.1} parent=31 // pred_check
          %p253 = pneg %p70
        $region34: #{tpu_custom_call.1} parent=31 // pred_check_branch
          %255 = sbr.rel (%p253) target = $region36
        $region35: #{tpu_custom_call.1} parent=31 // pred_region
          %257 = dma.done %s249, 64
        $region36: #{tpu_custom_call.1} parent=31 // pred_fallthru
          _
        // Predicated region
        $region37: #{tpu_custom_call.1} parent=31 // pred_check
          %p258 = pneg %p91
        $region38: #{tpu_custom_call.1} parent=31 // pred_check_branch
          %260 = sbr.rel (%p258) target = $region40
        $region39: #{tpu_custom_call.1} parent=31 // pred_region
          %262 = dma.done [#allocation8], 256
        $region40: #{tpu_custom_call.1} parent=31 // pred_fallthru
          _
        // Predicated region
        $region41: #{tpu_custom_call.1} parent=31 // pred_check
          %p263 = pneg %p117
        $region42: #{tpu_custom_call.1} parent=31 // pred_check_branch
          %265 = sbr.rel (%p263) target = $region44
        $region43: #{tpu_custom_call.1} parent=31 // pred_region
          %267 = dma.done [#allocation8], 64
        $region44: #{tpu_custom_call.1} parent=31 // pred_fallthru
          _
        %s268 = sand.u32 %s57, 1
        %s269 = scalar_lea.sflag [#allocation5], %s268
        %s270 = sand.u32 %s57, 1
        %s271 = smul.addr %s270, 4
        %s272 = scalar_lea.vmem [#allocation4], %s271
        %p273 = pneg %p70
        %p274 = pneg %p67
        %p275 = pneg %p91
        %p276 = pneg %p88
        %p277 = pneg %p117
        %p278 = pneg %p114
        %p279 = pneg %p145
        %p280 = pneg %p142
        %s281 = sand.u32 %s132, 1
        %s282 = scalar_lea.sflag [#allocation6], %s281
        %s283 = sand.u32 %s132, 1
        %s284 = smul.addr %s283, 4
        %s285 = scalar_lea.vmem [#allocation10], %s284
        %p286 = pneg %p173
        %p287 = pneg %p170
        %s288 = sand.u32 %s160, 1
        %s289 = scalar_lea.sflag [#allocation12], %s288
        %s290 = sand.u32 %s160, 1
        %s291 = smul.addr %s290, 4
        %s292 = scalar_lea.vmem [#allocation11], %s291
        %s293 = smul.u32 %s33, 128
        %p294 = scmp.eq.s32.totalorder %s33, 0
        // Predicated region
        $region45: #{tpu_custom_call.1} parent=31 // pred_check
          %p295 = pneg %p294
        $region46: #{tpu_custom_call.1} parent=31 // pred_check_branch
          %297 = sbr.rel (%p295) target = $region48
        $region47: #{tpu_custom_call.1} parent=31 // pred_region
          %298 = vst [vmem:[#allocation2] sm:$0xff] -inf
          %299 = vst [vmem:[#allocation2 + $0x8] sm:$0xff] -inf
          %300 = vst [vmem:[#allocation2 + $0x10] sm:$0xff] -inf
          %301 = vst [vmem:[#allocation2 + $0x18] sm:$0xff] -inf
          %302 = vst [vmem:[#allocation3] sm:$0xff] 0
          %303 = vst [vmem:[#allocation3 + $0x8] sm:$0xff] 0
          %304 = vst [vmem:[#allocation3 + $0x10] sm:$0xff] 0
          %305 = vst [vmem:[#allocation3 + $0x18] sm:$0xff] 0
        $region48: #{tpu_custom_call.1} parent=31 // pred_fallthru
          _
        %v306 = vlaneseq
        %v307 = vand.u32 %v306, 127
        %v308 = vld [vmem:[#allocation2] sm:$0xff]
        %v309 = vld [vmem:[#allocation2 + $0x8] sm:$0xff]
        %v310 = vld [vmem:[#allocation2 + $0x10] sm:$0xff]
        %v311 = vld [vmem:[#allocation2 + $0x18] sm:$0xff]
        %v312 = vld [vmem:[#allocation3] sm:$0xff]
        %v313 = vld [vmem:[#allocation3 + $0x8] sm:$0xff]
        %v314 = vld [vmem:[#allocation3 + $0x10] sm:$0xff]
        %v315 = vld [vmem:[#allocation3 + $0x18] sm:$0xff]
        %s316 = sadd.s32 %s293, 0
        %v317 = vld [vmem:[%s252] sm:$0xf]
        %v318 = vstv %s316
        %v319 = vadd.s32 %v318, %v307
        %vm320 = vcmp.lt.s32.totalorder %v319, 144
        %v321 = vsel %vm320, 1, 0
        %vm322 = vcmp.eq.s32.totalorder %v321, 1
        %v323 = vsel %vm322, %v317, -inf
        %s324 = sshra.s32 %s316, 7
        %s325 = sand.u32 %s316, 127
        %s326 = smul.addr %s324, 8
        %s327 = scalar_lea.vmem [#allocation7], %s326
        %v328 = vld [vmem:[%s327] sm:$0xff]
        %v330 = vrot.slane %v323, 1
        %v331 = vrot.slane %v323, 2
        %v332 = vrot.slane %v323, 3
        %v333 = vperm.slane %v323, 0
        %v334 = vperm.slane %v330, 0
        %v335 = vperm.slane %v331, 0
        %v336 = vperm.slane %v332, 0
        %v341 = vmul.f32 %v333, %v328
        %v342 = vmul.f32 %v334, %v328
        %v343 = vmul.f32 %v335, %v328
        %v344 = vmul.f32 %v336, %v328
        %vm345 = vcmp.gt.f32.partialorder %v341, %v308
        %vm346 = vcmp.gt.f32.partialorder %v342, %v309
        %vm347 = vcmp.gt.f32.partialorder %v343, %v310
        %vm348 = vcmp.gt.f32.partialorder %v344, %v311
        %v349 = vsel %vm345, %v341, %v308
        %v350 = vsel %vm346, %v342, %v309
        %v351 = vsel %vm347, %v343, %v310
        %v352 = vsel %vm348, %v344, %v311
        %v353 = vsel %vm345, %v319, %v312
        %v354 = vsel %vm346, %v319, %v313
        %v355 = vsel %vm347, %v319, %v314
        %v356 = vsel %vm348, %v319, %v315
        %p357 = scmp.lt.s32.totalorder %s33, 1
        // Predicated region
        $region49: #{tpu_custom_call.1} parent=31 // pred_check
          %p358 = pneg %p357
        $region50: #{tpu_custom_call.1} parent=31 // pred_check_branch
          %360 = sbr.rel (%p358) target = $region52
        $region51: #{tpu_custom_call.1} parent=31 // pred_region
          %361 = vst [vmem:[#allocation2] sm:$0xff] %v349
          %362 = vst [vmem:[#allocation2 + $0x8] sm:$0xff] %v350
          %363 = vst [vmem:[#allocation2 + $0x10] sm:$0xff] %v351
          %364 = vst [vmem:[#allocation2 + $0x18] sm:$0xff] %v352
          %365 = vst [vmem:[#allocation3] sm:$0xff] %v353
          %366 = vst [vmem:[#allocation3 + $0x8] sm:$0xff] %v354
          %367 = vst [vmem:[#allocation3 + $0x10] sm:$0xff] %v355
          %368 = vst [vmem:[#allocation3 + $0x18] sm:$0xff] %v356
        $region52: #{tpu_custom_call.1} parent=31 // pred_fallthru
          _
        %p369 = scmp.eq.s32.totalorder %s33, 1
        // Predicated region
        $region53: #{tpu_custom_call.1} parent=31 // pred_check
          %p370 = pneg %p369
        $region54: #{tpu_custom_call.1} parent=31 // pred_check_branch
          %372 = sbr.rel (%p370) target = $region56
        $region55: #{tpu_custom_call.1} parent=31 // pred_region
          %373 = vmax.xlane.f32.xlu0 %v349
          %v374 = vpop.xlane.xlu0 %373
          %375 = vmax.xlane.f32.xlu0 %v350
          %v376 = vpop.xlane.xlu0 %375
          %377 = vmax.xlane.f32.xlu0 %v351
          %v378 = vpop.xlane.xlu0 %377
          %379 = vmax.xlane.f32.xlu0 %v352
          %v380 = vpop.xlane.xlu0 %379
          %vm381 = vcmp.ge.f32.partialorder %v349, %v374
          %vm382 = vcmp.ge.f32.partialorder %v350, %v376
          %vm383 = vcmp.ge.f32.partialorder %v351, %v378
          %vm384 = vcmp.ge.f32.partialorder %v352, %v380
          %v385 = vsel %vm381, %v353, 2147483647
          %v386 = vsel %vm382, %v354, 2147483647
          %v387 = vsel %vm383, %v355, 2147483647
          %v388 = vsel %vm384, %v356, 2147483647
          %v389 = vand.u32 %v385, 65535
          %v390 = vshra.s32 %v385, 16
          %v391 = vcvt.s32.f32 %v389
          %v392 = vcvt.s32.f32 %v390
          %393 = vmin.xlane.f32.xlu0 %v392
          %v394 = vpop.xlane.xlu0 %393
          %vm395 = vcmp.eq.f32.partialorder %v392, %v394
          %v396 = vsel %vm395, %v391, inf
          %397 = vmin.xlane.f32.xlu0 %v396
          %v398 = vpop.xlane.xlu0 %397
          %v399 = vcvt.f32.s32 %v398
          %v400 = vcvt.f32.s32 %v394
          %v401 = vshll.u32 %v400, 16
          %v402 = vadd.s32 %v401, %v399
          %v403 = vand.u32 %v386, 65535
          %v404 = vshra.s32 %v386, 16
          %v405 = vcvt.s32.f32 %v403
          %v406 = vcvt.s32.f32 %v404
          %407 = vmin.xlane.f32.xlu0 %v406
          %v408 = vpop.xlane.xlu0 %407
          %vm409 = vcmp.eq.f32.partialorder %v406, %v408
          %v410 = vsel %vm409, %v405, inf
          %411 = vmin.xlane.f32.xlu0 %v410
          %v412 = vpop.xlane.xlu0 %411
          %v413 = vcvt.f32.s32 %v412
          %v414 = vcvt.f32.s32 %v408
          %v415 = vshll.u32 %v414, 16
          %v416 = vadd.s32 %v415, %v413
          %v417 = vand.u32 %v387, 65535
          %v418 = vshra.s32 %v387, 16
          %v419 = vcvt.s32.f32 %v417
          %v420 = vcvt.s32.f32 %v418
          %421 = vmin.xlane.f32.xlu0 %v420
          %v422 = vpop.xlane.xlu0 %421
          %vm423 = vcmp.eq.f32.partialorder %v420, %v422
          %v424 = vsel %vm423, %v419, inf
          %425 = vmin.xlane.f32.xlu0 %v424
          %v426 = vpop.xlane.xlu0 %425
          %v427 = vcvt.f32.s32 %v426
          %v428 = vcvt.f32.s32 %v422
          %v429 = vshll.u32 %v428, 16
          %v430 = vadd.s32 %v429, %v427
          %v431 = vand.u32 %v388, 65535
          %v432 = vshra.s32 %v388, 16
          %v433 = vcvt.s32.f32 %v431
          %v434 = vcvt.s32.f32 %v432
          %435 = vmin.xlane.f32.xlu0 %v434
          %v436 = vpop.xlane.xlu0 %435
          %vm437 = vcmp.eq.f32.partialorder %v434, %v436
          %v438 = vsel %vm437, %v433, inf
          %439 = vmin.xlane.f32.xlu0 %v438
          %v440 = vpop.xlane.xlu0 %439
          %v441 = vcvt.f32.s32 %v440
          %v442 = vcvt.f32.s32 %v436
          %v443 = vshll.u32 %v442, 16
          %v444 = vadd.s32 %v443, %v441
          %v445 = vld [vmem:[#allocation9] sm:$0xf]
          %v447 = vperm.slane %v445, 0
          %v448 = vlaneseq
          %v449 = vshrl.u32 %v448, 7
          %451 = vset.pattern.permute.xlu0 %v449
          %452 = vperm.xlu0 %451, %v447
          %v453 = vpop.permute.xlu0 %452
          %v454 = vperm.slane %v445, 1
          %v455 = vlaneseq
          %v456 = vshrl.u32 %v455, 7
          %458 = vset.pattern.permute.xlu0 %v456
          %459 = vperm.xlu0 %458, %v454
          %v460 = vpop.permute.xlu0 %459
          %v461 = vperm.slane %v445, 2
          %v462 = vlaneseq
          %v463 = vshrl.u32 %v462, 7
          %465 = vset.pattern.permute.xlu0 %v463
          %466 = vperm.xlu0 %465, %v461
          %v467 = vpop.permute.xlu0 %466
          %v468 = vperm.slane %v445, 3
          %v469 = vlaneseq
          %v470 = vshrl.u32 %v469, 7
          %472 = vset.pattern.permute.xlu0 %v470
          %473 = vperm.xlu0 %472, %v468
          %v474 = vpop.permute.xlu0 %473
          %v479 = vmul.f32 %v374, %v453
          %v480 = vmul.f32 %v376, %v460
          %v481 = vmul.f32 %v378, %v467
          %v482 = vmul.f32 %v380, %v474
          %487 = vset.pattern.permute.xlu0 0
          %488 = vperm.xlu0 %487, %v479
          %v489 = vpop.permute.xlu0 %488
          %490 = vset.pattern.permute.xlu0 0
          %491 = vperm.xlu0 %490, %v480
          %v492 = vpop.permute.xlu0 %491
          %493 = vset.pattern.permute.xlu0 0
          %494 = vperm.xlu0 %493, %v481
          %v495 = vpop.permute.xlu0 %494
          %496 = vset.pattern.permute.xlu0 0
          %497 = vperm.xlu0 %496, %v482
          %v498 = vpop.permute.xlu0 %497
          %v499 = vperm.slane %v489, %v307
          %v500 = vperm.slane %v492, %v307
          %v501 = vperm.slane %v495, %v307
          %v502 = vperm.slane %v498, %v307
          %vm503 = vcmask 1041409
          %v504 = vsel %vm503, %v500, %v499
          %vm505 = vcmask 1042434
          %v506 = vsel %vm505, %v501, %v504
          %vm507 = vcmask 1043459
          %v508 = vsel %vm507, %v502, %v506
          %vm510 = vcmask 60416
          %511 = vst.msk [vmem:[%s285] sm:$0xf] %vm510, %v508
          %v512 = vperm.slane %v402, %v307
          %v513 = vperm.slane %v416, %v307
          %v514 = vperm.slane %v430, %v307
          %v515 = vperm.slane %v444, %v307
          %v516 = vsel %vm503, %v513, %v512
          %v517 = vsel %vm505, %v514, %v516
          %v518 = vsel %vm507, %v515, %v517
          %519 = vst.msk [vmem:[%s292] sm:$0xf] %vm510, %v518
        $region56: #{tpu_custom_call.1} parent=31 // pred_fallthru
          _
        %s520 = sand.u32 %s132, 1
        %s521 = scalar_lea.sflag [#allocation6], %s520
        %s522 = sand.u32 %s132, 1
        %s523 = smul.addr %s522, 4
        %s524 = scalar_lea.vmem [#allocation10], %s523
        %s525 = sand.u32 %s160, 1
        %s526 = scalar_lea.sflag [#allocation12], %s525
        %s527 = sand.u32 %s160, 1
        %s528 = smul.addr %s527, 4
        %s529 = scalar_lea.vmem [#allocation11], %s528
        // Predicated region
        $region57: #{tpu_custom_call.1} parent=31 // pred_check
          %p530 = pneg %p142
        $region58: #{tpu_custom_call.1} parent=31 // pred_check_branch
          %532 = sbr.rel (%p530) target = $region60
        $region59: #{tpu_custom_call.1} parent=31 // pred_region
          %534 = vsyncadd %s521, 0
          %s535 = sadd.s32 %s32, %s31
          %s536 = smul.addr %s535, 4
          %s537 = scalar_lea.hbm %s3, %s536
          %s539 = sshll.u32 %s524, 4
          %s540 = int_to_ptr.vmem [resolvable:$true] %s539
          %s541 = sshll.u32 %s537, 4
          %s542 = int_to_ptr.hbm [resolvable:$true] %s541
          %544 = dma.vmem_to_hbm [thread:$0]  %s540, 64, %s542, %s521
        $region60: #{tpu_custom_call.1} parent=31 // pred_fallthru
          _
        // Predicated region
        $region61: #{tpu_custom_call.1} parent=31 // pred_check
          %p545 = pneg %p170
        $region62: #{tpu_custom_call.1} parent=31 // pred_check_branch
          %547 = sbr.rel (%p545) target = $region64
        $region63: #{tpu_custom_call.1} parent=31 // pred_region
          %549 = vsyncadd %s526, 0
          %s550 = sadd.s32 %s32, %s31
          %s551 = smul.addr %s550, 4
          %s552 = scalar_lea.hbm %s4, %s551
          %s554 = sshll.u32 %s529, 4
          %s555 = int_to_ptr.vmem [resolvable:$true] %s554
          %s556 = sshll.u32 %s552, 4
          %s557 = int_to_ptr.hbm [resolvable:$true] %s556
          %559 = dma.vmem_to_hbm [thread:$0]  %s555, 64, %s557, %s526
        $region64: #{tpu_custom_call.1} parent=31 // pred_fallthru
          _
      $region32: #{tpu_custom_call.1} parent=5 // pred_fallthru
        _
      %p560 = scmp.le.s32.totalorder 2, %s21
      // Predicated region
      $region65: #{tpu_custom_call.1} parent=5 // pred_check
        %p561 = pneg %p560
      $region66: #{tpu_custom_call.1} parent=5 // pred_check_branch
        %563 = sbr.rel (%p561) target = $region68
      $region67: #{tpu_custom_call.1} parent=5 // pred_region
        %s564 = ssub.s32 %s21, 2
        // Predicated region
        $region69: #{tpu_custom_call.1} parent=67 // pred_check
          %p565 = pneg %p148
        $region70: #{tpu_custom_call.1} parent=67 // pred_check_branch
          %567 = sbr.rel (%p565) target = $region72
        $region71: #{tpu_custom_call.1} parent=67 // pred_region
          %s568 = sand.u32 %s133, 1
          %s569 = scalar_lea.sflag [#allocation6], %s568
          %s570 = sand.u32 %s133, 1
          %s571 = smul.addr %s570, 4
          %s572 = scalar_lea.vmem [#allocation10], %s571
          %574 = dma.done %s569, 64
        $region72: #{tpu_custom_call.1} parent=67 // pred_fallthru
          _
        // Predicated region
        $region73: #{tpu_custom_call.1} parent=67 // pred_check
          %p575 = pneg %p176
        $region74: #{tpu_custom_call.1} parent=67 // pred_check_branch
          %577 = sbr.rel (%p575) target = $region76
        $region75: #{tpu_custom_call.1} parent=67 // pred_region
          %s578 = sand.u32 %s161, 1
          %s579 = scalar_lea.sflag [#allocation12], %s578
          %s580 = sand.u32 %s161, 1
          %s581 = smul.addr %s580, 4
          %s582 = scalar_lea.vmem [#allocation11], %s581
          %584 = dma.done %s579, 64
        $region76: #{tpu_custom_call.1} parent=67 // pred_fallthru
          _
      $region68: #{tpu_custom_call.1} parent=5 // pred_fallthru
        _
    $region6: #{tpu_custom_call.1} parent=1 // loop_footer
      %s25 = sadd.s32 1, %s21
    $region7: #{tpu_custom_call.1} parent=1 // loop_footer_branch
      %20 = sbr.rel target = $region3
    $region8: #{tpu_custom_call.1} parent=1 // loop_exit
      _
    %585 = vsyncpa [#allocation5], 1
    %s586 = scalar_lea.sflag [#allocation5], 1
    %587 = vsyncpa %s586, 1
    %588 = vsyncpa [#allocation8], 1
    %589 = vsyncpa [#allocation6], 1
    %s590 = scalar_lea.sflag [#allocation6], 1
    %591 = vsyncpa %s590, 1
    %592 = vsyncpa [#allocation12], 1
    %s593 = scalar_lea.sflag [#allocation12], 1
    %594 = vsyncpa %s593, 1

</llo_original>
